<compile_context>
chip_gen: v7x
topology: tpu7x:2x2x1
jax: 0.10.0
libtpu: 0.0.40
codegen_flags: <defaults>
</compile_context>

<pallas_src>
import functools

import jax
import jax.numpy as jnp
from jax import lax
from jax.experimental import pallas as pl
from jax.experimental.pallas import tpu as pltpu


def _round_up(n, m):
    return ((n + m - 1) // m) * m


def _device_kind():
    try:
        return jax.devices()[0].device_kind.lower()
    except Exception:
        return ""


def _buffered_blockspec_supported():
    """Probe whether BlockSpec(pipeline_mode=pl.Buffered(1)) can be built."""
    try:
        pl.BlockSpec((8, 128), lambda i: (0, 0), pipeline_mode=pl.Buffered(1))
        return True
    except Exception:  # TypeError (old kwarg) or AttributeError (no pl.Buffered)
        return False


def _mlp_kernel(x_ref, w1_ref, b1_ref, gamma_ref, beta_ref, w2_ref, b2_ref,
                o_ref, *, approximate_gelu):
    # ---- Linear 1 on the MXU: native operand dtype, f32 accumulation ----
    h = jnp.dot(x_ref[...], w1_ref[...], preferred_element_type=jnp.float32)
    h = h + b1_ref[...].astype(jnp.float32)

    # ---- LayerNorm over last dim (eps = 1e-5, PyTorch default), f32 ----
    # Single fused reduction pass: sum and sum-of-squares together.
    inv_n = jnp.float32(1.0 / h.shape[-1])
    s1 = jnp.sum(h, axis=-1, keepdims=True)
    s2 = jnp.sum(h * h, axis=-1, keepdims=True)
    mean = s1 * inv_n
    var = jnp.maximum(s2 * inv_n - mean * mean, 0.0)
    hn = (h - mean) * lax.rsqrt(var + 1e-5)
    hn = hn * gamma_ref[...].astype(jnp.float32) + beta_ref[...].astype(jnp.float32)

    # ---- GELU ----
    if approximate_gelu:
        # tanh approximation: transcendental goes to the EUP (separate slot).
        g = jax.nn.gelu(hn, approximate=True)
    else:
        # exact erf form, matching nn.GELU() default
        g = 0.5 * hn * (1.0 + lax.erf(hn * 0.7071067811865475))

    # ---- Linear 2 on the MXU: match the weight dtype, f32 accumulation ----
    y = jnp.dot(g.astype(w2_ref.dtype), w2_ref[...],
                preferred_element_type=jnp.float32)
    y = y + b2_ref[...].astype(jnp.float32)

    o_ref[...] = y.astype(o_ref.dtype)


def prediction_mlp(x, w1, b1, gamma, beta, w2, b2, *, tm=None,
                   approximate_gelu=False):
    """Pallas implementation of prediction_MLP.forward.

    x:     [B, in_dim]
    w1:    [in_dim, hidden_dim]   b1:    [hidden_dim]
    gamma: [hidden_dim]           beta:  [hidden_dim]
    w2:    [hidden_dim, in_dim]   b2:    [in_dim]

    For best performance pass bf16 w1/w2 (f32 accumulation is kept inside).
    """
    B, in_dim = x.shape
    hidden_dim = w1.shape[1]
    out_dtype = x.dtype

    # Match activation dtype to weight dtype at the boundary (no in-kernel cast
    # of the streamed tile; a small numerics change vs f32 when weights are bf16).
    if x.dtype != w1.dtype:
        x = x.astype(w1.dtype)

    # --- batch-tile choice -------------------------------------------------
    kind = _device_kind()
    is_single_tc = ("v5" in kind) or ("v6" in kind)   # 1 TensorCore per chip
    if tm is None:
        tm = 512 if is_single_tc else 256
        if not is_single_tc and B > 16:
            # v7x (or unknown): ensure >= 2 grid steps so both TCs get work.
            tm = min(tm, _round_up(pl.cdiv(B, 2), 16))
    # Multiple of 16 (sub-32-bit sublane packing), never larger than needed.
    tm = max(16, min(_round_up(tm, 16), _round_up(B, 16)))

    grid = (pl.cdiv(B, tm),)

    # Biases / LN params as [1, D] rows so they broadcast across the batch tile.
    b1_2d = b1.reshape(1, hidden_dim)
    gamma_2d = gamma.reshape(1, hidden_dim)
    beta_2d = beta.reshape(1, hidden_dim)
    b2_2d = b2.reshape(1, in_dim)

    buffered_ok = _buffered_blockspec_supported()

    def _resident(shape):
        # Constant index_map across the grid: fetched once, revisited.
        idx = lambda i: (0,) * len(shape)
        if buffered_ok:
            return pl.BlockSpec(shape, idx, pipeline_mode=pl.Buffered(1))
        return pl.BlockSpec(shape, idx)

    # --- VMEM budget ---------------------------------------------------------
    isz = lambda a: jnp.dtype(a.dtype).itemsize
    isz_out = jnp.dtype(out_dtype).itemsize
    stream_bytes = 2 * tm * in_dim * isz(x) + 2 * tm * in_dim * isz_out  # x + out (dbl-buf)
    weight_copies = 1 if buffered_ok else 2          # fallback => double-buffered residents
    resident_bytes = weight_copies * (w1.size * isz(w1) + w2.size * isz(w2)) \
        + 8 * 128 * 4 * 4                            # padded bias/LN rows
    scratch_bytes = 4 * tm * hidden_dim * 4 \
        + tm * in_dim * 4                            # f32 h/LN/GELU temps + f32 y tile
    cap = (96 << 20) if is_single_tc else (48 << 20)  # v5e/v6e 128 MiB, v7x 64 MiB phys
    vmem_limit = int(min(cap, max(stream_bytes + resident_bytes + scratch_bytes
                                  + (4 << 20), 16 << 20)))

    # --- cost estimate (helps XLA schedule the surrounding graph) -----------
    flops = 4 * B * in_dim * hidden_dim  # two matmuls, 2*M*N*K each
    bytes_accessed = (x.size * isz(x)
                      + w1.size * isz(w1) + w2.size * isz(w2)
                      + (b1.size + gamma.size + beta.size + b2.size) * 4
                      + B * in_dim * isz_out)
    cost = pl.CostEstimate(flops=int(flops),
                           transcendentals=int(B * hidden_dim),
                           bytes_accessed=int(bytes_accessed))

    kernel = functools.partial(_mlp_kernel, approximate_gelu=approximate_gelu)

    out = pl.pallas_call(
        kernel,
        out_shape=jax.ShapeDtypeStruct((B, in_dim), out_dtype),
        grid_spec=pltpu.PrefetchScalarGridSpec(
            num_scalar_prefetch=0,
            grid=grid,
            in_specs=[
                pl.BlockSpec((tm, in_dim), lambda i: (i, 0)),  # x tile (streamed)
                _resident((in_dim, hidden_dim)),               # w1 (resident)
                _resident((1, hidden_dim)),                    # b1
                _resident((1, hidden_dim)),                    # gamma
                _resident((1, hidden_dim)),                    # beta
                _resident((hidden_dim, in_dim)),               # w2 (resident)
                _resident((1, in_dim)),                        # b2
            ],
            out_specs=pl.BlockSpec((tm, in_dim), lambda i: (i, 0)),
        ),
        compiler_params=pltpu.CompilerParams(
            dimension_semantics=("parallel",),
            vmem_limit_bytes=vmem_limit),
        cost_estimate=cost,
    )(x, w1, b1_2d, gamma_2d, beta_2d, w2, b2_2d)

    return out


def _reference(x, w1, b1, gamma, beta, w2, b2):
    h = x.astype(jnp.float32) @ w1.astype(jnp.float32) + b1.astype(jnp.float32)
    mean = jnp.mean(h, axis=-1, keepdims=True)
    var = jnp.mean((h - mean) ** 2, axis=-1, keepdims=True)
    hn = (h - mean) * lax.rsqrt(var + 1e-5) * gamma + beta
    g = 0.5 * hn * (1.0 + lax.erf(hn / jnp.sqrt(2.0)))
    return g @ w2.astype(jnp.float32) + b2.astype(jnp.float32)


if __name__ == "__main__":
    # Small shapes consistent with the module: x is [batch, in_dim].
    B, in_dim, hidden_dim = 16, 32, 64
    key = jax.random.PRNGKey(0)
    kx, kw1, kb1, kw2, kb2, kx2 = jax.random.split(key, 6)

    x = jax.random.normal(kx, (B, in_dim), dtype=jnp.float32)
    w1 = jax.random.normal(kw1, (in_dim, hidden_dim), dtype=jnp.float32) * 0.05
    b1 = jax.random.normal(kb1, (hidden_dim,), dtype=jnp.float32) * 0.01
    gamma = jnp.ones((hidden_dim,), dtype=jnp.float32)
    beta = jnp.zeros((hidden_dim,), dtype=jnp.float32)
    w2 = jax.random.normal(kw2, (hidden_dim, in_dim), dtype=jnp.float32) * 0.05
    b2 = jax.random.normal(kb2, (in_dim,), dtype=jnp.float32) * 0.01

    ref = _reference(x, w1, b1, gamma, beta, w2, b2)

    # --- f32 path: exact match vs reference ---
    out = jax.block_until_ready(prediction_mlp(x, w1, b1, gamma, beta, w2, b2))
    assert out.shape == (B, in_dim)
    assert jnp.allclose(out, ref, atol=1e-4, rtol=1e-4), "f32 mismatch vs reference"

    # --- ragged batch (no host-side pad; Pallas masks the partial last block) ---
    Bs = 12
    out_r = jax.block_until_ready(
        prediction_mlp(x[:Bs], w1, b1, gamma, beta, w2, b2))
    assert out_r.shape == (Bs, in_dim)
    assert jnp.allclose(out_r, ref[:Bs], atol=1e-4, rtol=1e-4), "ragged-batch mismatch"

    # --- multi-step grid with a ragged last block (explicit small tile) ---
    B2 = 40
    x2 = jax.random.normal(kx2, (B2, in_dim), dtype=jnp.float32)
    ref2 = _reference(x2, w1, b1, gamma, beta, w2, b2)
    out2 = jax.block_until_ready(
        prediction_mlp(x2, w1, b1, gamma, beta, w2, b2, tm=16))
    assert out2.shape == (B2, in_dim)
    assert jnp.allclose(out2, ref2, atol=1e-4, rtol=1e-4), "multi-tile mismatch"

    # --- bf16 weight/activation path (recommended: native MXU dtype, f32 acc) ---
    out_bf16 = jax.block_until_ready(
        prediction_mlp(x.astype(jnp.bfloat16),
                       w1.astype(jnp.bfloat16), b1, gamma, beta,
                       w2.astype(jnp.bfloat16), b2))
    assert out_bf16.shape == (B, in_dim)
    assert jnp.allclose(out_bf16.astype(jnp.float32), ref, atol=3e-2, rtol=3e-2), \
        "bf16 mismatch vs reference"

    print("KERNEL_OK")
</pallas_src>

<mosaic_0001>
module attributes {stable_mosaic.version = 11 : i64} {
  func.func @_mlp_kernel(%arg0: i32, %arg1: memref<16x32xf32, #tpu.memory_space<vmem>>, %arg2: memref<32x64xf32, #tpu.memory_space<vmem>>, %arg3: memref<1x64xf32, #tpu.memory_space<vmem>>, %arg4: memref<1x64xf32, #tpu.memory_space<vmem>>, %arg5: memref<1x64xf32, #tpu.memory_space<vmem>>, %arg6: memref<64x32xf32, #tpu.memory_space<vmem>>, %arg7: memref<1x32xf32, #tpu.memory_space<vmem>>, %arg8: memref<16x32xf32, #tpu.memory_space<vmem>>) attributes {dimension_semantics = [#tpu.dimension_semantics<parallel>], iteration_bounds = array<i64: 1>, scalar_prefetch = 0 : i64, scratch_operands = 0 : i64, tpu.core_type = #tpu.core_type<tc>, window_params = [{transform_indices = @transform_0, window_bounds = array<i64: 16, 32>}, {pipeline_mode = #tpu.pipeline_mode<synchronous>, transform_indices = @transform_1, window_bounds = array<i64: 32, 64>}, {pipeline_mode = #tpu.pipeline_mode<synchronous>, transform_indices = @transform_2, window_bounds = array<i64: 1, 64>}, {pipeline_mode = #tpu.pipeline_mode<synchronous>, transform_indices = @transform_3, window_bounds = array<i64: 1, 64>}, {pipeline_mode = #tpu.pipeline_mode<synchronous>, transform_indices = @transform_4, window_bounds = array<i64: 1, 64>}, {pipeline_mode = #tpu.pipeline_mode<synchronous>, transform_indices = @transform_5, window_bounds = array<i64: 64, 32>}, {pipeline_mode = #tpu.pipeline_mode<synchronous>, transform_indices = @transform_6, window_bounds = array<i64: 1, 32>}, {transform_indices = @transform_7, window_bounds = array<i64: 16, 32>}]} {
    %c0 = arith.constant 0 : index
    %c0_0 = arith.constant 0 : index
    %0 = vector.load %arg1[%c0, %c0_0] : memref<16x32xf32, #tpu.memory_space<vmem>>, vector<16x32xf32>
    %c0_1 = arith.constant 0 : index
    %c0_2 = arith.constant 0 : index
    %1 = vector.load %arg2[%c0_1, %c0_2] : memref<32x64xf32, #tpu.memory_space<vmem>>, vector<32x64xf32>
    %cst = arith.constant dense<0.000000e+00> : vector<16x64xf32>
    %2 = tpu.matmul %0, %1, %cst {dimension_numbers = #tpu.dot_dimension_numbers<[1], [0], [0], [1], [0, 0, 1, 1], [], []>} : vector<16x32xf32>, vector<32x64xf32>, vector<16x64xf32> -> vector<16x64xf32>
    %c0_3 = arith.constant 0 : index
    %c0_4 = arith.constant 0 : index
    %3 = vector.load %arg3[%c0_3, %c0_4] : memref<1x64xf32, #tpu.memory_space<vmem>>, vector<1x64xf32>
    %4 = vector.broadcast %3 : vector<1x64xf32> to vector<16x64xf32>
    %5 = arith.addf %2, %4 : vector<16x64xf32>
    %cst_5 = arith.constant dense<0.000000e+00> : vector<16xf32>
    %6 = vector.multi_reduction <add>, %5, %cst_5 [1] : vector<16x64xf32> to vector<16xf32>
    %7 = vector.shape_cast %6 : vector<16xf32> to vector<16x1xf32>
    %8 = arith.mulf %5, %5 : vector<16x64xf32>
    %cst_6 = arith.constant dense<0.000000e+00> : vector<16xf32>
    %9 = vector.multi_reduction <add>, %8, %cst_6 [1] : vector<16x64xf32> to vector<16xf32>
    %10 = vector.shape_cast %9 : vector<16xf32> to vector<16x1xf32>
    %cst_7 = arith.constant 1.562500e-02 : f32
    %11 = vector.broadcast %cst_7 : f32 to vector<16x1xf32>
    %12 = arith.mulf %7, %11 : vector<16x1xf32>
    %cst_8 = arith.constant 1.562500e-02 : f32
    %13 = vector.broadcast %cst_8 : f32 to vector<16x1xf32>
    %14 = arith.mulf %10, %13 : vector<16x1xf32>
    %15 = arith.mulf %12, %12 : vector<16x1xf32>
    %16 = arith.subf %14, %15 : vector<16x1xf32>
    %cst_9 = arith.constant 0.000000e+00 : f32
    %17 = vector.broadcast %cst_9 : f32 to vector<16x1xf32>
    %18 = arith.maximumf %16, %17 : vector<16x1xf32>
    %19 = vector.broadcast %12 : vector<16x1xf32> to vector<16x64xf32>
    %20 = arith.subf %5, %19 : vector<16x64xf32>
    %cst_10 = arith.constant 9.99999974E-6 : f32
    %21 = vector.broadcast %cst_10 : f32 to vector<16x1xf32>
    %22 = arith.addf %18, %21 : vector<16x1xf32>
    %23 = math.rsqrt %22 : vector<16x1xf32>
    %24 = vector.broadcast %23 : vector<16x1xf32> to vector<16x64xf32>
    %25 = arith.mulf %20, %24 : vector<16x64xf32>
    %c0_11 = arith.constant 0 : index
    %c0_12 = arith.constant 0 : index
    %26 = vector.load %arg4[%c0_11, %c0_12] : memref<1x64xf32, #tpu.memory_space<vmem>>, vector<1x64xf32>
    %27 = vector.broadcast %26 : vector<1x64xf32> to vector<16x64xf32>
    %28 = arith.mulf %25, %27 : vector<16x64xf32>
    %c0_13 = arith.constant 0 : index
    %c0_14 = arith.constant 0 : index
    %29 = vector.load %arg5[%c0_13, %c0_14] : memref<1x64xf32, #tpu.memory_space<vmem>>, vector<1x64xf32>
    %30 = vector.broadcast %29 : vector<1x64xf32> to vector<16x64xf32>
    %31 = arith.addf %28, %30 : vector<16x64xf32>
    %cst_15 = arith.constant 5.000000e-01 : f32
    %32 = vector.broadcast %cst_15 : f32 to vector<16x64xf32>
    %33 = arith.mulf %32, %31 : vector<16x64xf32>
    %cst_16 = arith.constant 0.707106769 : f32
    %34 = vector.broadcast %cst_16 : f32 to vector<16x64xf32>
    %35 = arith.mulf %31, %34 : vector<16x64xf32>
    %36 = math.erf %35 : vector<16x64xf32>
    %cst_17 = arith.constant 1.000000e+00 : f32
    %37 = vector.broadcast %cst_17 : f32 to vector<16x64xf32>
    %38 = arith.addf %37, %36 : vector<16x64xf32>
    %39 = arith.mulf %33, %38 : vector<16x64xf32>
    %c0_18 = arith.constant 0 : index
    %c0_19 = arith.constant 0 : index
    %40 = vector.load %arg6[%c0_18, %c0_19] : memref<64x32xf32, #tpu.memory_space<vmem>>, vector<64x32xf32>
    %cst_20 = arith.constant dense<0.000000e+00> : vector<16x32xf32>
    %41 = tpu.matmul %39, %40, %cst_20 {dimension_numbers = #tpu.dot_dimension_numbers<[1], [0], [0], [1], [0, 0, 1, 1], [], []>} : vector<16x64xf32>, vector<64x32xf32>, vector<16x32xf32> -> vector<16x32xf32>
    %c0_21 = arith.constant 0 : index
    %c0_22 = arith.constant 0 : index
    %42 = vector.load %arg7[%c0_21, %c0_22] : memref<1x32xf32, #tpu.memory_space<vmem>>, vector<1x32xf32>
    %43 = vector.broadcast %42 : vector<1x32xf32> to vector<16x32xf32>
    %44 = arith.addf %41, %43 : vector<16x32xf32>
    %c0_23 = arith.constant 0 : index
    %c0_24 = arith.constant 0 : index
    %45 = vector.load %arg8[%c0_23, %c0_24] : memref<16x32xf32, #tpu.memory_space<vmem>>, vector<16x32xf32>
    tpu.vector_store %arg8[%c0_23, %c0_24], %44 {strides = array<i32>} : memref<16x32xf32, #tpu.memory_space<vmem>>, vector<16x32xf32>,
    return
  }
  func.func @transform_0(%arg0: i32) -> (i32, i32) {
    %c0_i32 = arith.constant 0 : i32
    %c0_i32_0 = arith.constant 0 : i32
    return %arg0, %c0_i32 : i32, i32
  }
  func.func @transform_1(%arg0: i32) -> (i32, i32) {
    %c0_i32 = arith.constant 0 : i32
    %c0_i32_0 = arith.constant 0 : i32
    %c0_i32_1 = arith.constant 0 : i32
    return %c0_i32, %c0_i32_0 : i32, i32
  }
  func.func @transform_2(%arg0: i32) -> (i32, i32) {
    %c0_i32 = arith.constant 0 : i32
    %c0_i32_0 = arith.constant 0 : i32
    %c0_i32_1 = arith.constant 0 : i32
    return %c0_i32, %c0_i32_0 : i32, i32
  }
  func.func @transform_3(%arg0: i32) -> (i32, i32) {
    %c0_i32 = arith.constant 0 : i32
    %c0_i32_0 = arith.constant 0 : i32
    %c0_i32_1 = arith.constant 0 : i32
    return %c0_i32, %c0_i32_0 : i32, i32
  }
  func.func @transform_4(%arg0: i32) -> (i32, i32) {
    %c0_i32 = arith.constant 0 : i32
    %c0_i32_0 = arith.constant 0 : i32
    %c0_i32_1 = arith.constant 0 : i32
    return %c0_i32, %c0_i32_0 : i32, i32
  }
  func.func @transform_5(%arg0: i32) -> (i32, i32) {
    %c0_i32 = arith.constant 0 : i32
    %c0_i32_0 = arith.constant 0 : i32
    %c0_i32_1 = arith.constant 0 : i32
    return %c0_i32, %c0_i32_0 : i32, i32
  }
  func.func @transform_6(%arg0: i32) -> (i32, i32) {
    %c0_i32 = arith.constant 0 : i32
    %c0_i32_0 = arith.constant 0 : i32
    %c0_i32_1 = arith.constant 0 : i32
    return %c0_i32, %c0_i32_0 : i32, i32
  }
  func.func @transform_7(%arg0: i32) -> (i32, i32) {
    %c0_i32 = arith.constant 0 : i32
    %c0_i32_0 = arith.constant 0 : i32
    return %arg0, %c0_i32 : i32, i32
  }
}

</mosaic_0001>

<llo_original>
// kernel: tpu_custom_call.1
$region0: #{tpu_custom_call.1}
  #allocation0 [shape = 'u32[]', space=smem, size = 0x4, offset = 0x4, fixed_abs, tag = 'smem constant byte address 0x4 - core index']
  #allocation1 [shape = 'u32[144,128]{1,0:T(1,128)}', space=vmem, size = 0x12000, scoped, tag = 'internal scratch']
  %s0 = inlined_call_operand.vmem [shape: f32[16,32], index: 0, kind: input, shape index: {}]
  %s1 = inlined_call_operand.vmem [shape: f32[32,64], index: 1, kind: input, shape index: {}]
  %s2 = inlined_call_operand.vmem [shape: f32[1,64], index: 2, kind: input, shape index: {}]
  %s3 = inlined_call_operand.vmem [shape: f32[1,64], index: 3, kind: input, shape index: {}]
  %s4 = inlined_call_operand.vmem [shape: f32[1,64], index: 4, kind: input, shape index: {}]
  %s5 = inlined_call_operand.vmem [shape: f32[64,32], index: 5, kind: input, shape index: {}]
  %s6 = inlined_call_operand.vmem [shape: f32[1,32], index: 6, kind: input, shape index: {}]
  %s7 = inlined_call_operand.hbm [shape: f32[16,32], index: 7, kind: output, shape index: {}]
  %s8 = sld [smem:[#allocation0]]
  $region38: #{tpu_custom_call.1} parent=0
    _
  %s10 = ssub.s32 1, %s8
  %s11 = scalar_select 0, %s10, %s8
  $region1: #{tpu_custom_call.1} parent=0
    #allocation2 [shape = 'u8[8192]{0}', space=vmem, size = 0x2000, scoped, tag = 'output window, operand 0, single buffered']
    #allocation3 [shape = 's32[1]{0}', space=sflag, size = 0x4, scoped, tag = 'scoped memory for tpu_custom_call.1']
    %12 = vsyncpa [#allocation3], 0
    // Predicated region
    $region2: #{tpu_custom_call.1} parent=1 // pred_check
      _
    $region3: #{tpu_custom_call.1} parent=1 // pred_check_branch
      %14 = sbr.rel (0) target = $region5
    $region4: #{tpu_custom_call.1} parent=1 // pred_region
      _
    $region5: #{tpu_custom_call.1} parent=1 // pred_fallthru
      _
    // Predicated region
    $region6: #{tpu_custom_call.1} parent=1 // pred_check
      _
    $region7: #{tpu_custom_call.1} parent=1 // pred_check_branch
      %16 = sbr.rel (0) target = $region9
    $region8: #{tpu_custom_call.1} parent=1 // pred_region
      _
    $region9: #{tpu_custom_call.1} parent=1 // pred_fallthru
      _
    // Predicated region
    $region10: #{tpu_custom_call.1} parent=1 // pred_check
      _
    $region11: #{tpu_custom_call.1} parent=1 // pred_check_branch
      %18 = sbr.rel (0) target = $region13
    $region12: #{tpu_custom_call.1} parent=1 // pred_region
      _
    $region13: #{tpu_custom_call.1} parent=1 // pred_fallthru
      _
    // Predicated region
    $region14: #{tpu_custom_call.1} parent=1 // pred_check
      _
    $region15: #{tpu_custom_call.1} parent=1 // pred_check_branch
      %20 = sbr.rel (0) target = $region17
    $region16: #{tpu_custom_call.1} parent=1 // pred_region
      _
    $region17: #{tpu_custom_call.1} parent=1 // pred_fallthru
      _
    // Predicated region
    $region18: #{tpu_custom_call.1} parent=1 // pred_check
      _
    $region19: #{tpu_custom_call.1} parent=1 // pred_check_branch
      %22 = sbr.rel (0) target = $region21
    $region20: #{tpu_custom_call.1} parent=1 // pred_region
      _
    $region21: #{tpu_custom_call.1} parent=1 // pred_fallthru
      _
    // Predicated region
    $region22: #{tpu_custom_call.1} parent=1 // pred_check
      _
    $region23: #{tpu_custom_call.1} parent=1 // pred_check_branch
      %24 = sbr.rel (0) target = $region25
    $region24: #{tpu_custom_call.1} parent=1 // pred_region
      _
    $region25: #{tpu_custom_call.1} parent=1 // pred_fallthru
      _
    // Predicated region
    $region26: #{tpu_custom_call.1} parent=1 // pred_check
      _
    $region27: #{tpu_custom_call.1} parent=1 // pred_check_branch
      %26 = sbr.rel (0) target = $region29
    $region28: #{tpu_custom_call.1} parent=1 // pred_region
      _
    $region29: #{tpu_custom_call.1} parent=1 // pred_fallthru
      _
    %v27 = vld [vmem:[%s0] sm:$0xff]
    %v28 = vld [vmem:[%s0 + $0x8] sm:$0xff]
    %v29 = vld [vmem:[%s1] sm:$0xff]
    %v30 = vld [vmem:[%s1 + $0x8] sm:$0xff]
    %v31 = vld [vmem:[%s1 + $0x10] sm:$0xff]
    %v32 = vld [vmem:[%s1 + $0x18] sm:$0xff]
    %v33 = vld [vmem:[%s2] sm:$0x1]
    %v35 = vlaneseq
    %v36 = vshrl.u32 %v35, 7
    %v37 = vsub.s32 0, %v36
    %v38 = vrot.slane %v33, %v37
    %vm40 = vcmask 261120
    %v42 = vsel %vm40, %v27, 0
    %v45 = vsel %vm40, %v28, 0
    %47 = vmatprep.subr.mxu0 0.0
    %48 = vmatpush1.msra.mxu0 %v29
    %49 = vmatprep.subr.mxu0 0.0
    %50 = vmatpush1.msra.mxu0 %v30
    %51 = vmatprep.subr.mxu0 0.0
    %52 = vmatpush1.msra.mxu0 %v31
    %53 = vmatprep.subr.mxu0 0.0
    %54 = vmatpush1.msra.mxu0 %v32
    %55 = vmatprep.subr.mxu0 0.0
    %56 = vmatpush1.msra.mxu0 0.0
    %57 = vmatprep.subr.mxu0 0.0
    %58 = vmatpush1.msra.mxu0 0.0
    %59 = vmatprep.subr.mxu0 0.0
    %60 = vmatpush1.msra.mxu0 0.0
    %61 = vmatprep.subr.mxu0 0.0
    %62 = vmatpush1.msra.mxu0 0.0
    %63 = vmatprep.subr.mxu0 0.0
    %64 = vmatpush1.msra.mxu0 0.0
    %65 = vmatprep.subr.mxu0 0.0
    %66 = vmatpush1.msra.mxu0 0.0
    %67 = vmatprep.subr.mxu0 0.0
    %68 = vmatpush1.msra.mxu0 0.0
    %69 = vmatprep.subr.mxu0 0.0
    %70 = vmatpush1.msra.mxu0 0.0
    %71 = vmatprep.subr.mxu0 0.0
    %72 = vmatpush1.msra.mxu0 0.0
    %73 = vmatprep.subr.mxu0 0.0
    %74 = vmatpush1.msra.mxu0 0.0
    %75 = vmatprep.subr.mxu0 0.0
    %76 = vmatpush1.msra.mxu0 0.0
    %77 = vmatprep.subr.mxu0 0.0
    %78 = vmatpush1.msra.mxu0 0.0
    %79 = vmatprep.subr.mxu0 0.0
    %80 = vmatpush1.msra.mxu0 0.0
    %81 = vmatprep.subr.mxu0 0.0
    %82 = vmatpush1.msra.mxu0 0.0
    %83 = vmatprep.subr.mxu0 0.0
    %84 = vmatpush1.msra.mxu0 0.0
    %85 = vmatprep.subr.mxu0 0.0
    %86 = vmatpush1.msra.mxu0 0.0
    %87 = vmatprep.subr.mxu0 0.0
    %88 = vmatpush1.msra.mxu0 0.0
    %89 = vmatprep.subr.mxu0 0.0
    %90 = vmatpush1.msra.mxu0 0.0
    %91 = vmatprep.subr.mxu0 0.0
    %92 = vmatpush1.msra.mxu0 0.0
    %93 = vmatprep.subr.mxu0 0.0
    %94 = vmatpush1.msra.mxu0 0.0
    %95 = vmatprep.subr.mxu0 0.0
    %96 = vmatpush1.msra.mxu0 0.0
    %97 = vmatprep.subr.mxu0 0.0
    %98 = vmatpush1.msra.mxu0 0.0
    %99 = vmatprep.subr.mxu0 0.0
    %100 = vmatpush1.msra.mxu0 0.0
    %101 = vmatprep.subr.mxu0 0.0
    %102 = vmatpush1.msra.mxu0 0.0
    %103 = vmatprep.subr.mxu0 0.0
    %104 = vmatpush1.msra.mxu0 0.0
    %105 = vmatprep.subr.mxu0 0.0
    %106 = vmatpush1.msra.mxu0 0.0
    %107 = vmatprep.subr.mxu0 0.0
    %108 = vmatpush1.msra.mxu0 0.0
    %109 = vmatprep.subr.mxu0 0.0
    %110 = vmatpush1.msra.mxu0 0.0
    %111 = vmatprep.mubr.f32.mxu0 0.0
    %112 = vmatmul.mubr.f32.gmra.mrb[0].mxu0 %v42
    %v113 = vpop.f32.mrb[0].mxu0
    %v114 = vadd.f32 %v38, %v113
    %v115 = vpop.f32.mrb[0].mxu0
    %116 = vmatprep.mubr.f32.mxu0 0.0
    %117 = vmatmul.mubr.f32.gmra.mrb[0].mxu0 %v45
    %v118 = vpop.f32.mrb[0].mxu0
    %v119 = vadd.f32 %v38, %v118
    %v120 = vpop.f32.mrb[0].mxu0
    %121 = vdwg.mxu0
    %vm122 = vcmask 523264
    %v123 = vsel %vm122, %v114, 0.0
    %124 = vadd.xlane.f32.xlu0 %v123
    %v125 = vpop.xlane.xlu0 %124
    %v126 = vsel %vm122, %v119, 0.0
    %127 = vadd.xlane.f32.xlu0 %v126
    %v128 = vpop.xlane.xlu0 %127
    %v129 = vmul.f32 %v114, %v114
    %v130 = vmul.f32 %v119, %v119
    %v131 = vsel %vm122, %v129, 0.0
    %132 = vadd.xlane.f32.xlu0 %v131
    %v133 = vpop.xlane.xlu0 %132
    %v134 = vsel %vm122, %v130, 0.0
    %135 = vadd.xlane.f32.xlu0 %v134
    %v136 = vpop.xlane.xlu0 %135
    %v137 = vmul.f32 %v125, 0.015625
    %v138 = vmul.f32 %v128, 0.015625
    %v139 = vmul.f32 %v133, 0.015625
    %v140 = vmul.f32 %v136, 0.015625
    %v141 = vmul.f32 %v137, %v137
    %v142 = vmul.f32 %v138, %v138
    %v143 = vsub.f32 %v139, %v141
    %v144 = vsub.f32 %v140, %v142
    %v145 = vmax.f32 %v143, 0.0
    %v146 = vmax.f32 %v144, 0.0
    %v147 = vsub.f32 %v114, %v137
    %v148 = vsub.f32 %v119, %v138
    %v149 = vadd.f32 %v145, 1e-05
    %v150 = vadd.f32 %v146, 1e-05
    %v151 = vrsqrt.pop %v149
    %v152 = vrsqrt.pop %v150
    %v153 = vmul.f32 %v147, %v151
    %v154 = vmul.f32 %v148, %v152
    %v155 = vld [vmem:[%s3] sm:$0x1]
    %v157 = vlaneseq
    %v158 = vshrl.u32 %v157, 7
    %v159 = vsub.s32 0, %v158
    %v160 = vrot.slane %v155, %v159
    %v162 = vmul.f32 %v153, %v160
    %v163 = vmul.f32 %v154, %v160
    %v164 = vld [vmem:[%s4] sm:$0x1]
    %v166 = vlaneseq
    %v167 = vshrl.u32 %v166, 7
    %v168 = vsub.s32 0, %v167
    %v169 = vrot.slane %v164, %v168
    %v171 = vadd.f32 %v162, %v169
    %v172 = vadd.f32 %v163, %v169
    %v173 = vmul.f32 %v171, 0.5
    %v174 = vmul.f32 %v172, 0.5
    %v175 = vmul.f32 %v171, 0.70710677
    %v176 = vmul.f32 %v172, 0.70710677
    %v177 = verf.f32.pop %v175
    %v178 = verf.f32.pop %v176
    %v179 = vadd.f32 %v177, 1.0
    %v180 = vadd.f32 %v178, 1.0
    %v181 = vmul.f32 %v173, %v179
    %v182 = vmul.f32 %v174, %v180
    %v183 = vld [vmem:[%s5] sm:$0xff]
    %v184 = vld [vmem:[%s5 + $0x8] sm:$0xff]
    %v185 = vld [vmem:[%s5 + $0x10] sm:$0xff]
    %v186 = vld [vmem:[%s5 + $0x18] sm:$0xff]
    %v187 = vld [vmem:[%s5 + $0x20] sm:$0xff]
    %v188 = vld [vmem:[%s5 + $0x28] sm:$0xff]
    %v189 = vld [vmem:[%s5 + $0x30] sm:$0xff]
    %v190 = vld [vmem:[%s5 + $0x38] sm:$0xff]
    %v191 = vld [vmem:[%s6] sm:$0x1]
    %v193 = vlaneseq
    %v194 = vshrl.u32 %v193, 7
    %v195 = vsub.s32 0, %v194
    %v196 = vrot.slane %v191, %v195
    %v199 = vsel %vm122, %v181, 0
    %v202 = vsel %vm122, %v182, 0
    %204 = vmatprep.subr.mxu0 0.0
    %205 = vmatpush1.msra.mxu0 %v183
    %206 = vmatprep.subr.mxu0 0.0
    %207 = vmatpush1.msra.mxu0 %v184
    %208 = vmatprep.subr.mxu0 0.0
    %209 = vmatpush1.msra.mxu0 %v185
    %210 = vmatprep.subr.mxu0 0.0
    %211 = vmatpush1.msra.mxu0 %v186
    %212 = vmatprep.subr.mxu0 0.0
    %213 = vmatpush1.msra.mxu0 %v187
    %214 = vmatprep.subr.mxu0 0.0
    %215 = vmatpush1.msra.mxu0 %v188
    %216 = vmatprep.subr.mxu0 0.0
    %217 = vmatpush1.msra.mxu0 %v189
    %218 = vmatprep.subr.mxu0 0.0
    %219 = vmatpush1.msra.mxu0 %v190
    %220 = vmatprep.subr.mxu0 0.0
    %221 = vmatpush1.msra.mxu0 0.0
    %222 = vmatprep.subr.mxu0 0.0
    %223 = vmatpush1.msra.mxu0 0.0
    %224 = vmatprep.subr.mxu0 0.0
    %225 = vmatpush1.msra.mxu0 0.0
    %226 = vmatprep.subr.mxu0 0.0
    %227 = vmatpush1.msra.mxu0 0.0
    %228 = vmatprep.subr.mxu0 0.0
    %229 = vmatpush1.msra.mxu0 0.0
    %230 = vmatprep.subr.mxu0 0.0
    %231 = vmatpush1.msra.mxu0 0.0
    %232 = vmatprep.subr.mxu0 0.0
    %233 = vmatpush1.msra.mxu0 0.0
    %234 = vmatprep.subr.mxu0 0.0
    %235 = vmatpush1.msra.mxu0 0.0
    %236 = vmatprep.subr.mxu0 0.0
    %237 = vmatpush1.msra.mxu0 0.0
    %238 = vmatprep.subr.mxu0 0.0
    %239 = vmatpush1.msra.mxu0 0.0
    %240 = vmatprep.subr.mxu0 0.0
    %241 = vmatpush1.msra.mxu0 0.0
    %242 = vmatprep.subr.mxu0 0.0
    %243 = vmatpush1.msra.mxu0 0.0
    %244 = vmatprep.subr.mxu0 0.0
    %245 = vmatpush1.msra.mxu0 0.0
    %246 = vmatprep.subr.mxu0 0.0
    %247 = vmatpush1.msra.mxu0 0.0
    %248 = vmatprep.subr.mxu0 0.0
    %249 = vmatpush1.msra.mxu0 0.0
    %250 = vmatprep.subr.mxu0 0.0
    %251 = vmatpush1.msra.mxu0 0.0
    %252 = vmatprep.subr.mxu0 0.0
    %253 = vmatpush1.msra.mxu0 0.0
    %254 = vmatprep.subr.mxu0 0.0
    %255 = vmatpush1.msra.mxu0 0.0
    %256 = vmatprep.subr.mxu0 0.0
    %257 = vmatpush1.msra.mxu0 0.0
    %258 = vmatprep.subr.mxu0 0.0
    %259 = vmatpush1.msra.mxu0 0.0
    %260 = vmatprep.subr.mxu0 0.0
    %261 = vmatpush1.msra.mxu0 0.0
    %262 = vmatprep.subr.mxu0 0.0
    %263 = vmatpush1.msra.mxu0 0.0
    %264 = vmatprep.subr.mxu0 0.0
    %265 = vmatpush1.msra.mxu0 0.0
    %266 = vmatprep.subr.mxu0 0.0
    %267 = vmatpush1.msra.mxu0 0.0
    %268 = vmatprep.mubr.f32.mxu0 0.0
    %269 = vmatmul.mubr.f32.gmra.mrb[0].mxu0 %v199
    %v270 = vpop.f32.mrb[0].mxu0
    %v271 = vadd.f32 %v196, %v270
    %v272 = vpop.f32.mrb[0].mxu0
    %273 = vmatprep.mubr.f32.mxu0 0.0
    %274 = vmatmul.mubr.f32.gmra.mrb[0].mxu0 %v202
    %v275 = vpop.f32.mrb[0].mxu0
    %v276 = vadd.f32 %v196, %v275
    %v277 = vpop.f32.mrb[0].mxu0
    %278 = vdwg.mxu0
    %279 = vst.msk [vmem:[#allocation2] sm:$0xff] %vm40, %v271
    %280 = vst.msk [vmem:[#allocation2 + $0x8] sm:$0xff] %vm40, %v276
    // Predicated region
    $region30: #{tpu_custom_call.1} parent=1 // pred_check
      _
    $region31: #{tpu_custom_call.1} parent=1 // pred_check_branch
      %282 = sbr.rel (0) target = $region33
    $region32: #{tpu_custom_call.1} parent=1 // pred_region
      %s284 = ssub.s32 256, 256
      %285 = vsyncadd [#allocation3], %s284
      %s286 = sshll.u32 [#allocation2], 4
      %s287 = int_to_ptr.vmem [resolvable:$true] %s286
      %292 = dma.vmem_to_hbm [thread:$0]  %s287, 256, %s7, [#allocation3], 128, 128, 8
    $region33: #{tpu_custom_call.1} parent=1 // pred_fallthru
      _
    // Predicated region
    $region34: #{tpu_custom_call.1} parent=1 // pred_check
      _
    $region35: #{tpu_custom_call.1} parent=1 // pred_check_branch
      %294 = sbr.rel (0) target = $region37
    $region36: #{tpu_custom_call.1} parent=1 // pred_region
      %295 = dma.done [#allocation3], 256
    $region37: #{tpu_custom_call.1} parent=1 // pred_fallthru
      _
    %296 = vsyncpa [#allocation3], 1

</llo_original>
